<compile_context>
chip_gen: v7x
topology: tpu7x:2x2x1
jax: 0.10.0
libtpu: 0.0.40
codegen_flags: <defaults>
</compile_context>

<pallas_src>
import jax
import jax.numpy as jnp
import numpy as np
from jax import lax
from jax.experimental import pallas as pl
from jax.experimental.pallas import tpu as pltpu

CLASSES = 10
CLASSES_PAD = 16     # one-hot width used in-kernel (rows >= CLASSES are zero)
LANE = 128           # hidden feature dims padded to full 128-lane vregs
MAX_TILE_B = 2048    # batch-tile cap (VMEM-safe on v5e default scoped limit)


def _round_up(x, m):
    return (x + m - 1) // m * m


# ---------------------------------------------------------------------------
# Kernel
# ---------------------------------------------------------------------------
def encoder_kernel(x_ref, c_ref, w0x_ref, w0c_ref, b0_ref,
                   w1_ref, b1_ref, wh_ref, bh_ref, out_ref):
    # x: [TB, D_raw] bf16, c: [TB, 1] int32, weights bf16 (zero-padded),
    # biases f32.  All matmuls accumulate in f32 on the MXU.  Output is the
    # compact [TB, 2*latent] f32 slab [means | log_vars].
    x = x_ref[...]

    # Build the class one-hot in-kernel (replaces wrapper-side one_hot + the
    # `reap` concatenates).  In the non-conditional case w0c is all zeros, so
    # this term contributes nothing.
    cls = lax.broadcasted_iota(jnp.int32, (x.shape[0], CLASSES_PAD), 1)
    onehot = (cls == c_ref[...]).astype(jnp.bfloat16)        # [TB, CLASSES_PAD]

    # Hidden layer 0:  relu([x | onehot]*reap @ W0 + b0)
    h = jnp.dot(x, w0x_ref[...], preferred_element_type=jnp.float32)
    h = h + jnp.dot(onehot, w0c_ref[...], preferred_element_type=jnp.float32)
    h = jnp.maximum(h + b0_ref[...], 0.0)

    # Hidden layer 1:  relu(h @ W1 + b1)
    h = jnp.dot(h.astype(jnp.bfloat16), w1_ref[...],
                preferred_element_type=jnp.float32)
    h = jnp.maximum(h + b1_ref[...], 0.0)

    # Fused output heads -> compact [TB, 2*latent]: [means | log_vars]
    out = jnp.dot(h.astype(jnp.bfloat16), wh_ref[...],
                  preferred_element_type=jnp.float32)
    out_ref[...] = out + bh_ref[...]


# ---------------------------------------------------------------------------
# Parameters (PyTorch-style f32 init, stored transposed: [in, out])
# ---------------------------------------------------------------------------
def init_linear(key, in_size, out_size):
    # Mimic PyTorch nn.Linear default init: U(-1/sqrt(in), 1/sqrt(in)).
    kw, kb = jax.random.split(key)
    bound = 1.0 / np.sqrt(in_size)
    w = jax.random.uniform(kw, (in_size, out_size), jnp.float32, -bound, bound)
    b = jax.random.uniform(kb, (1, out_size), jnp.float32, -bound, bound)
    return w, b


def make_encoder_params(key, layer_sizes, latent_size, reap, conditional, num_labels):
    sizes = list(layer_sizes)
    if conditional:
        sizes[0] += reap * num_labels
    keys = jax.random.split(key, len(sizes) + 1)
    params = {}
    for i, (in_s, out_s) in enumerate(zip(sizes[:-1], sizes[1:])):
        params[f"w{i}"], params[f"b{i}"] = init_linear(keys[i], in_s, out_s)
    params["wm"], params["bm"] = init_linear(keys[-2], sizes[-1], latent_size)
    params["wv"], params["bv"] = init_linear(keys[-1], sizes[-1], latent_size)
    return params


def prepare_kernel_params(params, *, d_raw, reap, conditional, num_labels=CLASSES):
    """Fuse / pad / bf16-cast the f32 params into the kernel layout."""
    w0, b0 = params["w0"], params["b0"]          # [D_in, H1], [1, H1]
    w1, b1 = params["w1"], params["b1"]          # [H1, H2],  [1, H2]
    wm, bm = params["wm"], params["bm"]          # [H2, L],   [1, L]
    wv, bv = params["wv"], params["bv"]

    h1, h2, latent = w0.shape[1], w1.shape[1], wm.shape[1]
    h1p = _round_up(h1, LANE)
    h2p = _round_up(h2, LANE)
    out_dim = 2 * latent                          # compact output, no lane pad

    # Split W0 into raw-feature rows and the (reap-folded) class rows:
    #   [x | onehot | ... | onehot] @ W0  ==  x @ W0x + onehot @ sum_r W0c_r
    w0x = w0[:d_raw]
    if conditional:
        w0c = sum(w0[d_raw + r * num_labels: d_raw + (r + 1) * num_labels]
                  for r in range(reap))
    else:
        w0c = jnp.zeros((num_labels, h1), jnp.float32)

    def pad(a, shape):
        return jnp.zeros(shape, a.dtype).at[:a.shape[0], :a.shape[1]].set(a)

    kp = {
        "w0x": pad(w0x, (d_raw, h1p)).astype(jnp.bfloat16),
        "w0c": pad(w0c, (CLASSES_PAD, h1p)).astype(jnp.bfloat16),
        "b0": pad(b0, (1, h1p)),
        "w1": pad(w1, (h1p, h2p)).astype(jnp.bfloat16),
        "b1": pad(b1, (1, h2p)),
        "wh": pad(jnp.concatenate([wm, wv], axis=1), (h2p, out_dim)).astype(jnp.bfloat16),
        "bh": jnp.concatenate([bm, bv], axis=1),          # (1, 2*latent) f32
        "latent": latent,
        "out_dim": out_dim,
    }
    return kp


# ---------------------------------------------------------------------------
# Forward wrapper
# ---------------------------------------------------------------------------
def _choose_tile_b(B):
    # Small batches: one tile, rounded to 16 sublanes (bf16 vreg packing).
    if B <= 32:
        return _round_up(B, 16)
    # Larger batches: at least 2 grid steps so both v7x TensorCores get work
    # under dimension_semantics=("parallel",); cap at MAX_TILE_B to amortize
    # the ~0.35 us per-step overhead while staying under v5e's 16 MiB default
    # scoped VMEM (double-buffered working set ~5 MiB at TB=2048).
    return min(MAX_TILE_B, _round_up((B + 1) // 2, 16))


def encoder_forward(x, c, kparams, *, conditional):
    B, d_raw = x.shape
    latent = kparams["latent"]
    out_dim = kparams["out_dim"]

    TB = _choose_tile_b(B)
    B_pad = _round_up(B, TB)

    x = x.astype(jnp.bfloat16)                   # halve x HBM read traffic
    if B_pad != B:
        x = jnp.zeros((B_pad, d_raw), jnp.bfloat16).at[:B].set(x)
    if conditional:
        c2 = c.astype(jnp.int32).reshape(-1, 1)
        if B_pad != B:
            c2 = jnp.zeros((B_pad, 1), jnp.int32).at[:B].set(c2)
    else:
        c2 = jnp.zeros((B_pad, 1), jnp.int32)

    grid = (B_pad // TB,)

    def row_spec(f):
        return pl.BlockSpec((TB, f), lambda i: (i, 0))

    def full_spec(a):
        # Constant index_map -> block stays VMEM-resident across the grid.
        return pl.BlockSpec(a.shape, lambda i: (0, 0))

    operands = (x, c2,
                kparams["w0x"], kparams["w0c"], kparams["b0"],
                kparams["w1"], kparams["b1"],
                kparams["wh"], kparams["bh"])

    in_specs = [row_spec(d_raw), row_spec(1)] + [full_spec(a) for a in operands[2:]]

    out = pl.pallas_call(
        encoder_kernel,
        out_shape=jax.ShapeDtypeStruct((B_pad, out_dim), jnp.float32),
        grid=grid,
        in_specs=in_specs,
        out_specs=row_spec(out_dim),
        compiler_params=pltpu.CompilerParams(
            dimension_semantics=("parallel",)),
    )(*operands)

    # Single compact slice of the unpadded output, then split.
    # TODO(synk): if a downstream reparameterization (z = mean + eps*exp(.5*lv))
    # exists, fuse it into the kernel so only [B, latent] leaves HBM.
    out = out[:B] if B_pad != B else out
    return out[:, :latent], out[:, latent:]


# ---------------------------------------------------------------------------
# Pure-JAX f32 reference (original module semantics)
# ---------------------------------------------------------------------------
def encoder_reference(x, c, params, *, reap, conditional):
    if conditional:
        c1h = jax.nn.one_hot(c, CLASSES, dtype=jnp.float32)
        for _ in range(reap):
            x = jnp.concatenate([x, c1h], axis=-1)
    h = jnp.maximum(x @ params["w0"] + params["b0"], 0.0)
    h = jnp.maximum(h @ params["w1"] + params["b1"], 0.0)
    return h @ params["wm"] + params["bm"], h @ params["wv"] + params["bv"]


if __name__ == "__main__":
    # Small, forward-consistent config (2 hidden layers, as the kernel assumes).
    layer_sizes = [32, 64, 32]   # raw input size 32, two hidden layers
    latent_size = 16
    reap = 2
    conditional = True
    num_labels = CLASSES
    batch = 8

    key = jax.random.PRNGKey(0)
    kx, kc, kp = jax.random.split(key, 3)

    x = jax.random.normal(kx, (batch, layer_sizes[0]), jnp.float32)
    c = jax.random.randint(kc, (batch,), 0, CLASSES, jnp.int32)

    params = make_encoder_params(
        kp, layer_sizes, latent_size, reap, conditional, num_labels)
    kparams = prepare_kernel_params(
        params, d_raw=layer_sizes[0], reap=reap,
        conditional=conditional, num_labels=num_labels)

    means, log_vars = encoder_forward(x, c, kparams, conditional=conditional)
    means = jax.block_until_ready(means)
    log_vars = jax.block_until_ready(log_vars)

    ref_means, ref_log_vars = encoder_reference(
        x, c, params, reap=reap, conditional=conditional)

    # bf16 matmul operands with f32 accumulation -> loose-ish tolerance vs the
    # full-f32 reference.
    np.testing.assert_allclose(np.asarray(means), np.asarray(ref_means),
                               rtol=5e-2, atol=5e-2)
    np.testing.assert_allclose(np.asarray(log_vars), np.asarray(ref_log_vars),
                               rtol=5e-2, atol=5e-2)

    print("KERNEL_OK")
</pallas_src>

<mosaic_0001>
module attributes {stable_mosaic.version = 11 : i64} {
  func.func @encoder_kernel(%arg0: i32, %arg1: memref<16x32xbf16, #tpu.memory_space<vmem>>, %arg2: memref<16x1xi32, #tpu.memory_space<vmem>>, %arg3: memref<32x128xbf16, #tpu.memory_space<vmem>>, %arg4: memref<16x128xbf16, #tpu.memory_space<vmem>>, %arg5: memref<1x128xf32, #tpu.memory_space<vmem>>, %arg6: memref<128x128xbf16, #tpu.memory_space<vmem>>, %arg7: memref<1x128xf32, #tpu.memory_space<vmem>>, %arg8: memref<128x32xbf16, #tpu.memory_space<vmem>>, %arg9: memref<1x32xf32, #tpu.memory_space<vmem>>, %arg10: memref<16x32xf32, #tpu.memory_space<vmem>>) attributes {dimension_semantics = [#tpu.dimension_semantics<parallel>], iteration_bounds = array<i64: 1>, scalar_prefetch = 0 : i64, scratch_operands = 0 : i64, tpu.core_type = #tpu.core_type<tc>, window_params = [{transform_indices = @transform_0, window_bounds = array<i64: 16, 32>}, {transform_indices = @transform_1, window_bounds = array<i64: 16, 1>}, {pipeline_mode = #tpu.pipeline_mode<synchronous>, transform_indices = @transform_2, window_bounds = array<i64: 32, 128>}, {pipeline_mode = #tpu.pipeline_mode<synchronous>, transform_indices = @transform_3, window_bounds = array<i64: 16, 128>}, {pipeline_mode = #tpu.pipeline_mode<synchronous>, transform_indices = @transform_4, window_bounds = array<i64: 1, 128>}, {pipeline_mode = #tpu.pipeline_mode<synchronous>, transform_indices = @transform_5, window_bounds = array<i64: 128, 128>}, {pipeline_mode = #tpu.pipeline_mode<synchronous>, transform_indices = @transform_6, window_bounds = array<i64: 1, 128>}, {pipeline_mode = #tpu.pipeline_mode<synchronous>, transform_indices = @transform_7, window_bounds = array<i64: 128, 32>}, {pipeline_mode = #tpu.pipeline_mode<synchronous>, transform_indices = @transform_8, window_bounds = array<i64: 1, 32>}, {transform_indices = @transform_9, window_bounds = array<i64: 16, 32>}]} {
    %c0 = arith.constant 0 : index
    %c0_0 = arith.constant 0 : index
    %0 = vector.load %arg1[%c0, %c0_0] : memref<16x32xbf16, #tpu.memory_space<vmem>>, vector<16x32xbf16>
    %1 = tpu.iota {dimensions = array<i32: 1>} : vector<16x16xi32>
    %c0_1 = arith.constant 0 : index
    %c0_2 = arith.constant 0 : index
    %2 = vector.load %arg2[%c0_1, %c0_2] : memref<16x1xi32, #tpu.memory_space<vmem>>, vector<16x1xi32>
    %3 = vector.broadcast %2 : vector<16x1xi32> to vector<16x16xi32>
    %4 = arith.cmpi eq, %1, %3 : vector<16x16xi32>
    %5 = arith.extui %4 : vector<16x16xi1> to vector<16x16xi32>
    %6 = arith.sitofp %5 : vector<16x16xi32> to vector<16x16xf32>
    %7 = arith.truncf %6 : vector<16x16xf32> to vector<16x16xbf16>
    %c0_3 = arith.constant 0 : index
    %c0_4 = arith.constant 0 : index
    %8 = vector.load %arg3[%c0_3, %c0_4] : memref<32x128xbf16, #tpu.memory_space<vmem>>, vector<32x128xbf16>
    %cst = arith.constant dense<0.000000e+00> : vector<16x128xf32>
    %9 = tpu.matmul %0, %8, %cst {dimension_numbers = #tpu.dot_dimension_numbers<[1], [0], [0], [1], [0, 0, 1, 1], [], []>} : vector<16x32xbf16>, vector<32x128xbf16>, vector<16x128xf32> -> vector<16x128xf32>
    %c0_5 = arith.constant 0 : index
    %c0_6 = arith.constant 0 : index
    %10 = vector.load %arg4[%c0_5, %c0_6] : memref<16x128xbf16, #tpu.memory_space<vmem>>, vector<16x128xbf16>
    %cst_7 = arith.constant dense<0.000000e+00> : vector<16x128xf32>
    %11 = tpu.matmul %7, %10, %cst_7 {dimension_numbers = #tpu.dot_dimension_numbers<[1], [0], [0], [1], [0, 0, 1, 1], [], []>} : vector<16x16xbf16>, vector<16x128xbf16>, vector<16x128xf32> -> vector<16x128xf32>
    %12 = arith.addf %9, %11 : vector<16x128xf32>
    %c0_8 = arith.constant 0 : index
    %c0_9 = arith.constant 0 : index
    %13 = vector.load %arg5[%c0_8, %c0_9] : memref<1x128xf32, #tpu.memory_space<vmem>>, vector<1x128xf32>
    %14 = vector.broadcast %13 : vector<1x128xf32> to vector<16x128xf32>
    %15 = arith.addf %12, %14 : vector<16x128xf32>
    %cst_10 = arith.constant 0.000000e+00 : f32
    %16 = vector.broadcast %cst_10 : f32 to vector<16x128xf32>
    %17 = arith.maximumf %15, %16 : vector<16x128xf32>
    %18 = arith.truncf %17 : vector<16x128xf32> to vector<16x128xbf16>
    %c0_11 = arith.constant 0 : index
    %c0_12 = arith.constant 0 : index
    %19 = vector.load %arg6[%c0_11, %c0_12] : memref<128x128xbf16, #tpu.memory_space<vmem>>, vector<128x128xbf16>
    %cst_13 = arith.constant dense<0.000000e+00> : vector<16x128xf32>
    %20 = tpu.matmul %18, %19, %cst_13 {dimension_numbers = #tpu.dot_dimension_numbers<[1], [0], [0], [1], [0, 0, 1, 1], [], []>} : vector<16x128xbf16>, vector<128x128xbf16>, vector<16x128xf32> -> vector<16x128xf32>
    %c0_14 = arith.constant 0 : index
    %c0_15 = arith.constant 0 : index
    %21 = vector.load %arg7[%c0_14, %c0_15] : memref<1x128xf32, #tpu.memory_space<vmem>>, vector<1x128xf32>
    %22 = vector.broadcast %21 : vector<1x128xf32> to vector<16x128xf32>
    %23 = arith.addf %20, %22 : vector<16x128xf32>
    %cst_16 = arith.constant 0.000000e+00 : f32
    %24 = vector.broadcast %cst_16 : f32 to vector<16x128xf32>
    %25 = arith.maximumf %23, %24 : vector<16x128xf32>
    %26 = arith.truncf %25 : vector<16x128xf32> to vector<16x128xbf16>
    %c0_17 = arith.constant 0 : index
    %c0_18 = arith.constant 0 : index
    %27 = vector.load %arg8[%c0_17, %c0_18] : memref<128x32xbf16, #tpu.memory_space<vmem>>, vector<128x32xbf16>
    %cst_19 = arith.constant dense<0.000000e+00> : vector<16x32xf32>
    %28 = tpu.matmul %26, %27, %cst_19 {dimension_numbers = #tpu.dot_dimension_numbers<[1], [0], [0], [1], [0, 0, 1, 1], [], []>} : vector<16x128xbf16>, vector<128x32xbf16>, vector<16x32xf32> -> vector<16x32xf32>
    %c0_20 = arith.constant 0 : index
    %c0_21 = arith.constant 0 : index
    %29 = vector.load %arg9[%c0_20, %c0_21] : memref<1x32xf32, #tpu.memory_space<vmem>>, vector<1x32xf32>
    %30 = vector.broadcast %29 : vector<1x32xf32> to vector<16x32xf32>
    %31 = arith.addf %28, %30 : vector<16x32xf32>
    %c0_22 = arith.constant 0 : index
    %c0_23 = arith.constant 0 : index
    %32 = vector.load %arg10[%c0_22, %c0_23] : memref<16x32xf32, #tpu.memory_space<vmem>>, vector<16x32xf32>
    tpu.vector_store %arg10[%c0_22, %c0_23], %31 {strides = array<i32>} : memref<16x32xf32, #tpu.memory_space<vmem>>, vector<16x32xf32>,
    return
  }
  func.func @transform_0(%arg0: i32) -> (i32, i32) {
    %c0_i32 = arith.constant 0 : i32
    %c0_i32_0 = arith.constant 0 : i32
    return %arg0, %c0_i32 : i32, i32
  }
  func.func @transform_1(%arg0: i32) -> (i32, i32) {
    %c0_i32 = arith.constant 0 : i32
    %c0_i32_0 = arith.constant 0 : i32
    return %arg0, %c0_i32 : i32, i32
  }
  func.func @transform_2(%arg0: i32) -> (i32, i32) {
    %c0_i32 = arith.constant 0 : i32
    %c0_i32_0 = arith.constant 0 : i32
    %c0_i32_1 = arith.constant 0 : i32
    return %c0_i32, %c0_i32_0 : i32, i32
  }
  func.func @transform_3(%arg0: i32) -> (i32, i32) {
    %c0_i32 = arith.constant 0 : i32
    %c0_i32_0 = arith.constant 0 : i32
    %c0_i32_1 = arith.constant 0 : i32
    return %c0_i32, %c0_i32_0 : i32, i32
  }
  func.func @transform_4(%arg0: i32) -> (i32, i32) {
    %c0_i32 = arith.constant 0 : i32
    %c0_i32_0 = arith.constant 0 : i32
    %c0_i32_1 = arith.constant 0 : i32
    return %c0_i32, %c0_i32_0 : i32, i32
  }
  func.func @transform_5(%arg0: i32) -> (i32, i32) {
    %c0_i32 = arith.constant 0 : i32
    %c0_i32_0 = arith.constant 0 : i32
    %c0_i32_1 = arith.constant 0 : i32
    return %c0_i32, %c0_i32_0 : i32, i32
  }
  func.func @transform_6(%arg0: i32) -> (i32, i32) {
    %c0_i32 = arith.constant 0 : i32
    %c0_i32_0 = arith.constant 0 : i32
    %c0_i32_1 = arith.constant 0 : i32
    return %c0_i32, %c0_i32_0 : i32, i32
  }
  func.func @transform_7(%arg0: i32) -> (i32, i32) {
    %c0_i32 = arith.constant 0 : i32
    %c0_i32_0 = arith.constant 0 : i32
    %c0_i32_1 = arith.constant 0 : i32
    return %c0_i32, %c0_i32_0 : i32, i32
  }
  func.func @transform_8(%arg0: i32) -> (i32, i32) {
    %c0_i32 = arith.constant 0 : i32
    %c0_i32_0 = arith.constant 0 : i32
    %c0_i32_1 = arith.constant 0 : i32
    return %c0_i32, %c0_i32_0 : i32, i32
  }
  func.func @transform_9(%arg0: i32) -> (i32, i32) {
    %c0_i32 = arith.constant 0 : i32
    %c0_i32_0 = arith.constant 0 : i32
    return %arg0, %c0_i32 : i32, i32
  }
}

</mosaic_0001>

<llo_original>
// kernel: tpu_custom_call.1
$region0: #{tpu_custom_call.1}
  #allocation0 [shape = 'u32[]', space=smem, size = 0x4, offset = 0x4, fixed_abs, tag = 'smem constant byte address 0x4 - core index']
  #allocation1 [shape = 'u32[144,128]{1,0:T(1,128)}', space=vmem, size = 0x12000, scoped, tag = 'internal scratch']
  %s0 = inlined_call_operand.vmem [shape: bf16[16,32], index: 0, kind: input, shape index: {}]
  %s1 = inlined_call_operand.vmem [shape: s32[16,1], index: 1, kind: input, shape index: {}]
  %s2 = inlined_call_operand.vmem [shape: bf16[32,128], index: 2, kind: input, shape index: {}]
  %s3 = inlined_call_operand.vmem [shape: bf16[16,128], index: 3, kind: input, shape index: {}]
  %s4 = inlined_call_operand.vmem [shape: f32[1,128], index: 4, kind: input, shape index: {}]
  %s5 = inlined_call_operand.vmem [shape: bf16[128,128], index: 5, kind: input, shape index: {}]
  %s6 = inlined_call_operand.vmem [shape: f32[1,128], index: 6, kind: input, shape index: {}]
  %s7 = inlined_call_operand.vmem [shape: bf16[128,32], index: 7, kind: input, shape index: {}]
  %s8 = inlined_call_operand.vmem [shape: f32[1,32], index: 8, kind: input, shape index: {}]
  %s9 = inlined_call_operand.hbm [shape: f32[16,32], index: 9, kind: output, shape index: {}]
  %s10 = sld [smem:[#allocation0]]
  $region46: #{tpu_custom_call.1} parent=0
    _
  %s12 = ssub.s32 1, %s10
  %s13 = scalar_select 0, %s12, %s10
  $region1: #{tpu_custom_call.1} parent=0
    #allocation2 [shape = 'u8[8192]{0}', space=vmem, size = 0x2000, scoped, tag = 'output window, operand 0, single buffered']
    #allocation3 [shape = 's32[1]{0}', space=sflag, size = 0x4, scoped, tag = 'scoped memory for tpu_custom_call.1']
    %14 = vsyncpa [#allocation3], 0
    // Predicated region
    $region2: #{tpu_custom_call.1} parent=1 // pred_check
      _
    $region3: #{tpu_custom_call.1} parent=1 // pred_check_branch
      %16 = sbr.rel (0) target = $region5
    $region4: #{tpu_custom_call.1} parent=1 // pred_region
      _
    $region5: #{tpu_custom_call.1} parent=1 // pred_fallthru
      _
    // Predicated region
    $region6: #{tpu_custom_call.1} parent=1 // pred_check
      _
    $region7: #{tpu_custom_call.1} parent=1 // pred_check_branch
      %18 = sbr.rel (0) target = $region9
    $region8: #{tpu_custom_call.1} parent=1 // pred_region
      _
    $region9: #{tpu_custom_call.1} parent=1 // pred_fallthru
      _
    // Predicated region
    $region10: #{tpu_custom_call.1} parent=1 // pred_check
      _
    $region11: #{tpu_custom_call.1} parent=1 // pred_check_branch
      %20 = sbr.rel (0) target = $region13
    $region12: #{tpu_custom_call.1} parent=1 // pred_region
      _
    $region13: #{tpu_custom_call.1} parent=1 // pred_fallthru
      _
    // Predicated region
    $region14: #{tpu_custom_call.1} parent=1 // pred_check
      _
    $region15: #{tpu_custom_call.1} parent=1 // pred_check_branch
      %22 = sbr.rel (0) target = $region17
    $region16: #{tpu_custom_call.1} parent=1 // pred_region
      _
    $region17: #{tpu_custom_call.1} parent=1 // pred_fallthru
      _
    // Predicated region
    $region18: #{tpu_custom_call.1} parent=1 // pred_check
      _
    $region19: #{tpu_custom_call.1} parent=1 // pred_check_branch
      %24 = sbr.rel (0) target = $region21
    $region20: #{tpu_custom_call.1} parent=1 // pred_region
      _
    $region21: #{tpu_custom_call.1} parent=1 // pred_fallthru
      _
    // Predicated region
    $region22: #{tpu_custom_call.1} parent=1 // pred_check
      _
    $region23: #{tpu_custom_call.1} parent=1 // pred_check_branch
      %26 = sbr.rel (0) target = $region25
    $region24: #{tpu_custom_call.1} parent=1 // pred_region
      _
    $region25: #{tpu_custom_call.1} parent=1 // pred_fallthru
      _
    // Predicated region
    $region26: #{tpu_custom_call.1} parent=1 // pred_check
      _
    $region27: #{tpu_custom_call.1} parent=1 // pred_check_branch
      %28 = sbr.rel (0) target = $region29
    $region28: #{tpu_custom_call.1} parent=1 // pred_region
      _
    $region29: #{tpu_custom_call.1} parent=1 // pred_fallthru
      _
    // Predicated region
    $region30: #{tpu_custom_call.1} parent=1 // pred_check
      _
    $region31: #{tpu_custom_call.1} parent=1 // pred_check_branch
      %30 = sbr.rel (0) target = $region33
    $region32: #{tpu_custom_call.1} parent=1 // pred_region
      _
    $region33: #{tpu_custom_call.1} parent=1 // pred_fallthru
      _
    // Predicated region
    $region34: #{tpu_custom_call.1} parent=1 // pred_check
      _
    $region35: #{tpu_custom_call.1} parent=1 // pred_check_branch
      %32 = sbr.rel (0) target = $region37
    $region36: #{tpu_custom_call.1} parent=1 // pred_region
      _
    $region37: #{tpu_custom_call.1} parent=1 // pred_fallthru
      _
    %v34 = vld [vmem:[%s0] sm:$0xf]
    %v35 = vld [vmem:[%s0 + $0x4] sm:$0xf]
    %v36 = vlaneseq
    %v37 = vand.u32 %v36, 127
    %v38 = vld [vmem:[%s1] sm:$0xff]
    %v39 = vld [vmem:[%s1 + $0x8] sm:$0xff]
    %40 = vset.pattern.permute.xlu0 0
    %41 = vperm.xlu0 %40, %v38
    %v42 = vpop.permute.xlu0 %41
    %43 = vset.pattern.permute.xlu0 0
    %44 = vperm.xlu0 %43, %v39
    %v45 = vpop.permute.xlu0 %44
    %vm46 = vcmp.eq.s32.totalorder %v37, %v42
    %vm47 = vcmp.eq.s32.totalorder %v37, %v45
    %v48 = vsel %vm46, 1, 0
    %v49 = vsel %vm47, 1, 0
    %v50 = vcvt.s32.f32 %v48
    %v51 = vcvt.s32.f32 %v49
    %v52 = vpack.c.bf16 %v51, %v50
    %v53 = vld [vmem:[%s2] sm:$0xf]
    %v54 = vld [vmem:[%s2 + $0x4] sm:$0xf]
    %v55 = vld [vmem:[%s2 + $0x8] sm:$0xf]
    %v56 = vld [vmem:[%s2 + $0xc] sm:$0xf]
    %v57 = vld [vmem:[%s3] sm:$0xf]
    %v58 = vld [vmem:[%s3 + $0x4] sm:$0xf]
    %v61 = vunpack.c.l.b16 %v57
    %v62 = vunpack.c.l.b16 %v58
    %v63 = vpack.c.b16 %v62, %v61
    %vm65 = vcmask 130048
    %v67 = vsel %vm65, %v52, 0
    %69 = vmatprep.subr.bf16.mxu0 0
    %70 = vmatpush1.bf16.msra.mxu0 %v63
    %71 = vmatprep.subr.bf16.mxu0 0
    %72 = vmatpush1.bf16.msra.mxu0 0
    %73 = vmatprep.subr.bf16.mxu0 0
    %74 = vmatpush1.bf16.msra.mxu0 0
    %75 = vmatprep.subr.bf16.mxu0 0
    %76 = vmatpush1.bf16.msra.mxu0 0
    %77 = vmatprep.subr.bf16.mxu0 0
    %78 = vmatpush1.bf16.msra.mxu0 0
    %79 = vmatprep.subr.bf16.mxu0 0
    %80 = vmatpush1.bf16.msra.mxu0 0
    %81 = vmatprep.subr.bf16.mxu0 0
    %82 = vmatpush1.bf16.msra.mxu0 0
    %83 = vmatprep.subr.bf16.mxu0 0
    %84 = vmatpush1.bf16.msra.mxu0 0
    %85 = vmatprep.subr.bf16.mxu0 0
    %86 = vmatpush1.bf16.msra.mxu0 0
    %87 = vmatprep.subr.bf16.mxu0 0
    %88 = vmatpush1.bf16.msra.mxu0 0
    %89 = vmatprep.subr.bf16.mxu0 0
    %90 = vmatpush1.bf16.msra.mxu0 0
    %91 = vmatprep.subr.bf16.mxu0 0
    %92 = vmatpush1.bf16.msra.mxu0 0
    %93 = vmatprep.subr.bf16.mxu0 0
    %94 = vmatpush1.bf16.msra.mxu0 0
    %95 = vmatprep.subr.bf16.mxu0 0
    %96 = vmatpush1.bf16.msra.mxu0 0
    %97 = vmatprep.subr.bf16.mxu0 0
    %98 = vmatpush1.bf16.msra.mxu0 0
    %99 = vmatprep.subr.bf16.mxu0 0
    %100 = vmatpush1.bf16.msra.mxu0 0
    %101 = vmatprep.mubr.bf16.mxu0 0
    %102 = vmatmul.mubr.bf16.gmra.mrb[0].mxu0 %v67
    %v103 = vpop.f32.mrb[0].mxu0
    %v104 = vadd.f32 0.0, %v103
    %v105 = vpop.f32.mrb[0].mxu0
    %v106 = vpop.f32.mrb[0].mxu0
    %v107 = vadd.f32 0.0, %v106
    %v108 = vpop.f32.mrb[0].mxu0
    %109 = vdwg.mxu0
    %v112 = vunpack.c.l.b16 %v34
    %v113 = vunpack.c.l.b16 %v35
    %v114 = vpack.c.b16 %v113, %v112
    %v119 = vunpack.c.l.b16 %v53
    %v120 = vunpack.c.l.b16 %v54
    %v121 = vunpack.c.l.b16 %v55
    %v122 = vunpack.c.l.b16 %v56
    %v123 = vpack.c.b16 %v120, %v119
    %v124 = vpack.c.b16 %v122, %v121
    %vm127 = vcmask 261120
    %v129 = vsel %vm127, %v114, 0
    %131 = vmatprep.subr.bf16.mxu0 0
    %132 = vmatpush1.bf16.msra.mxu0 %v123
    %133 = vmatprep.subr.bf16.mxu0 0
    %134 = vmatpush1.bf16.msra.mxu0 %v124
    %135 = vmatprep.subr.bf16.mxu0 0
    %136 = vmatpush1.bf16.msra.mxu0 0
    %137 = vmatprep.subr.bf16.mxu0 0
    %138 = vmatpush1.bf16.msra.mxu0 0
    %139 = vmatprep.subr.bf16.mxu0 0
    %140 = vmatpush1.bf16.msra.mxu0 0
    %141 = vmatprep.subr.bf16.mxu0 0
    %142 = vmatpush1.bf16.msra.mxu0 0
    %143 = vmatprep.subr.bf16.mxu0 0
    %144 = vmatpush1.bf16.msra.mxu0 0
    %145 = vmatprep.subr.bf16.mxu0 0
    %146 = vmatpush1.bf16.msra.mxu0 0
    %147 = vmatprep.subr.bf16.mxu0 0
    %148 = vmatpush1.bf16.msra.mxu0 0
    %149 = vmatprep.subr.bf16.mxu0 0
    %150 = vmatpush1.bf16.msra.mxu0 0
    %151 = vmatprep.subr.bf16.mxu0 0
    %152 = vmatpush1.bf16.msra.mxu0 0
    %153 = vmatprep.subr.bf16.mxu0 0
    %154 = vmatpush1.bf16.msra.mxu0 0
    %155 = vmatprep.subr.bf16.mxu0 0
    %156 = vmatpush1.bf16.msra.mxu0 0
    %157 = vmatprep.subr.bf16.mxu0 0
    %158 = vmatpush1.bf16.msra.mxu0 0
    %159 = vmatprep.subr.bf16.mxu0 0
    %160 = vmatpush1.bf16.msra.mxu0 0
    %161 = vmatprep.subr.bf16.mxu0 0
    %162 = vmatpush1.bf16.msra.mxu0 0
    %163 = vmatprep.mubr.bf16.mxu0 0
    %164 = vmatmul.mubr.bf16.gmra.mrb[0].mxu0 %v129
    %v165 = vpop.f32.mrb[0].mxu0
    %v166 = vadd.f32 %v104, %v165
    %v167 = vpop.f32.mrb[0].mxu0
    %v168 = vpop.f32.mrb[0].mxu0
    %v169 = vadd.f32 %v107, %v168
    %v170 = vpop.f32.mrb[0].mxu0
    %171 = vdwg.mxu0
    %v172 = vld [vmem:[%s4] sm:$0x1]
    %v174 = vlaneseq
    %v175 = vshrl.u32 %v174, 7
    %v176 = vsub.s32 0, %v175
    %v177 = vrot.slane %v172, %v176
    %v179 = vadd.f32 %v166, %v177
    %v180 = vadd.f32 %v169, %v177
    %v181 = vmax.f32 %v179, 0.0
    %v182 = vmax.f32 %v180, 0.0
    %v183 = vpack.c.bf16 %v182, %v181
    %v184 = vld [vmem:[%s5] sm:$0xf]
    %v185 = vld [vmem:[%s5 + $0x4] sm:$0xf]
    %v186 = vld [vmem:[%s5 + $0x8] sm:$0xf]
    %v187 = vld [vmem:[%s5 + $0xc] sm:$0xf]
    %v188 = vld [vmem:[%s5 + $0x10] sm:$0xf]
    %v189 = vld [vmem:[%s5 + $0x14] sm:$0xf]
    %v190 = vld [vmem:[%s5 + $0x18] sm:$0xf]
    %v191 = vld [vmem:[%s5 + $0x1c] sm:$0xf]
    %v192 = vld [vmem:[%s5 + $0x20] sm:$0xf]
    %v193 = vld [vmem:[%s5 + $0x24] sm:$0xf]
    %v194 = vld [vmem:[%s5 + $0x28] sm:$0xf]
    %v195 = vld [vmem:[%s5 + $0x2c] sm:$0xf]
    %v196 = vld [vmem:[%s5 + $0x30] sm:$0xf]
    %v197 = vld [vmem:[%s5 + $0x34] sm:$0xf]
    %v198 = vld [vmem:[%s5 + $0x38] sm:$0xf]
    %v199 = vld [vmem:[%s5 + $0x3c] sm:$0xf]
    %v200 = vld [vmem:[%s6] sm:$0x1]
    %v202 = vlaneseq
    %v203 = vshrl.u32 %v202, 7
    %v204 = vsub.s32 0, %v203
    %v205 = vrot.slane %v200, %v204
    %v223 = vunpack.c.l.b16 %v184
    %v224 = vunpack.c.l.b16 %v185
    %v225 = vunpack.c.l.b16 %v186
    %v226 = vunpack.c.l.b16 %v187
    %v227 = vunpack.c.l.b16 %v188
    %v228 = vunpack.c.l.b16 %v189
    %v229 = vunpack.c.l.b16 %v190
    %v230 = vunpack.c.l.b16 %v191
    %v231 = vunpack.c.l.b16 %v192
    %v232 = vunpack.c.l.b16 %v193
    %v233 = vunpack.c.l.b16 %v194
    %v234 = vunpack.c.l.b16 %v195
    %v235 = vunpack.c.l.b16 %v196
    %v236 = vunpack.c.l.b16 %v197
    %v237 = vunpack.c.l.b16 %v198
    %v238 = vunpack.c.l.b16 %v199
    %v239 = vpack.c.b16 %v224, %v223
    %v240 = vpack.c.b16 %v226, %v225
    %v241 = vpack.c.b16 %v228, %v227
    %v242 = vpack.c.b16 %v230, %v229
    %v243 = vpack.c.b16 %v232, %v231
    %v244 = vpack.c.b16 %v234, %v233
    %v245 = vpack.c.b16 %v236, %v235
    %v246 = vpack.c.b16 %v238, %v237
    %255 = vmatprep.subr.bf16.mxu0 0
    %256 = vmatpush1.bf16.msra.mxu0 %v239
    %257 = vmatprep.subr.bf16.mxu0 0
    %258 = vmatpush1.bf16.msra.mxu0 %v240
    %259 = vmatprep.subr.bf16.mxu0 0
    %260 = vmatpush1.bf16.msra.mxu0 %v241
    %261 = vmatprep.subr.bf16.mxu0 0
    %262 = vmatpush1.bf16.msra.mxu0 %v242
    %263 = vmatprep.subr.bf16.mxu0 0
    %264 = vmatpush1.bf16.msra.mxu0 %v243
    %265 = vmatprep.subr.bf16.mxu0 0
    %266 = vmatpush1.bf16.msra.mxu0 %v244
    %267 = vmatprep.subr.bf16.mxu0 0
    %268 = vmatpush1.bf16.msra.mxu0 %v245
    %269 = vmatprep.subr.bf16.mxu0 0
    %270 = vmatpush1.bf16.msra.mxu0 %v246
    %271 = vmatprep.subr.bf16.mxu0 0
    %272 = vmatpush1.bf16.msra.mxu0 0
    %273 = vmatprep.subr.bf16.mxu0 0
    %274 = vmatpush1.bf16.msra.mxu0 0
    %275 = vmatprep.subr.bf16.mxu0 0
    %276 = vmatpush1.bf16.msra.mxu0 0
    %277 = vmatprep.subr.bf16.mxu0 0
    %278 = vmatpush1.bf16.msra.mxu0 0
    %279 = vmatprep.subr.bf16.mxu0 0
    %280 = vmatpush1.bf16.msra.mxu0 0
    %281 = vmatprep.subr.bf16.mxu0 0
    %282 = vmatpush1.bf16.msra.mxu0 0
    %283 = vmatprep.subr.bf16.mxu0 0
    %284 = vmatpush1.bf16.msra.mxu0 0
    %285 = vmatprep.subr.bf16.mxu0 0
    %286 = vmatpush1.bf16.msra.mxu0 0
    %287 = vmatprep.mubr.bf16.mxu0 0
    %288 = vmatmul.mubr.bf16.gmra.mrb[0].mxu0 %v183
    %v289 = vpop.f32.mrb[0].mxu0
    %v290 = vadd.f32 %v205, %v289
    %v291 = vpop.f32.mrb[0].mxu0
    %v292 = vpop.f32.mrb[0].mxu0
    %v293 = vadd.f32 %v205, %v292
    %v294 = vpop.f32.mrb[0].mxu0
    %295 = vdwg.mxu0
    %v296 = vmax.f32 %v290, 0.0
    %v297 = vmax.f32 %v293, 0.0
    %v298 = vpack.c.bf16 %v297, %v296
    %v299 = vld [vmem:[%s7] sm:$0xf]
    %v300 = vld [vmem:[%s7 + $0x4] sm:$0xf]
    %v301 = vld [vmem:[%s7 + $0x8] sm:$0xf]
    %v302 = vld [vmem:[%s7 + $0xc] sm:$0xf]
    %v303 = vld [vmem:[%s7 + $0x10] sm:$0xf]
    %v304 = vld [vmem:[%s7 + $0x14] sm:$0xf]
    %v305 = vld [vmem:[%s7 + $0x18] sm:$0xf]
    %v306 = vld [vmem:[%s7 + $0x1c] sm:$0xf]
    %v307 = vld [vmem:[%s7 + $0x20] sm:$0xf]
    %v308 = vld [vmem:[%s7 + $0x24] sm:$0xf]
    %v309 = vld [vmem:[%s7 + $0x28] sm:$0xf]
    %v310 = vld [vmem:[%s7 + $0x2c] sm:$0xf]
    %v311 = vld [vmem:[%s7 + $0x30] sm:$0xf]
    %v312 = vld [vmem:[%s7 + $0x34] sm:$0xf]
    %v313 = vld [vmem:[%s7 + $0x38] sm:$0xf]
    %v314 = vld [vmem:[%s7 + $0x3c] sm:$0xf]
    %v315 = vld [vmem:[%s8] sm:$0x1]
    %v317 = vlaneseq
    %v318 = vshrl.u32 %v317, 7
    %v319 = vsub.s32 0, %v318
    %v320 = vrot.slane %v315, %v319
    %v338 = vunpack.c.l.b16 %v299
    %v339 = vunpack.c.l.b16 %v300
    %v340 = vunpack.c.l.b16 %v301
    %v341 = vunpack.c.l.b16 %v302
    %v342 = vunpack.c.l.b16 %v303
    %v343 = vunpack.c.l.b16 %v304
    %v344 = vunpack.c.l.b16 %v305
    %v345 = vunpack.c.l.b16 %v306
    %v346 = vunpack.c.l.b16 %v307
    %v347 = vunpack.c.l.b16 %v308
    %v348 = vunpack.c.l.b16 %v309
    %v349 = vunpack.c.l.b16 %v310
    %v350 = vunpack.c.l.b16 %v311
    %v351 = vunpack.c.l.b16 %v312
    %v352 = vunpack.c.l.b16 %v313
    %v353 = vunpack.c.l.b16 %v314
    %v354 = vpack.c.b16 %v339, %v338
    %v355 = vpack.c.b16 %v341, %v340
    %v356 = vpack.c.b16 %v343, %v342
    %v357 = vpack.c.b16 %v345, %v344
    %v358 = vpack.c.b16 %v347, %v346
    %v359 = vpack.c.b16 %v349, %v348
    %v360 = vpack.c.b16 %v351, %v350
    %v361 = vpack.c.b16 %v353, %v352
    %370 = vmatprep.subr.bf16.mxu0 0
    %371 = vmatpush1.bf16.msra.mxu0 %v354
    %372 = vmatprep.subr.bf16.mxu0 0
    %373 = vmatpush1.bf16.msra.mxu0 %v355
    %374 = vmatprep.subr.bf16.mxu0 0
    %375 = vmatpush1.bf16.msra.mxu0 %v356
    %376 = vmatprep.subr.bf16.mxu0 0
    %377 = vmatpush1.bf16.msra.mxu0 %v357
    %378 = vmatprep.subr.bf16.mxu0 0
    %379 = vmatpush1.bf16.msra.mxu0 %v358
    %380 = vmatprep.subr.bf16.mxu0 0
    %381 = vmatpush1.bf16.msra.mxu0 %v359
    %382 = vmatprep.subr.bf16.mxu0 0
    %383 = vmatpush1.bf16.msra.mxu0 %v360
    %384 = vmatprep.subr.bf16.mxu0 0
    %385 = vmatpush1.bf16.msra.mxu0 %v361
    %386 = vmatprep.subr.bf16.mxu0 0
    %387 = vmatpush1.bf16.msra.mxu0 0
    %388 = vmatprep.subr.bf16.mxu0 0
    %389 = vmatpush1.bf16.msra.mxu0 0
    %390 = vmatprep.subr.bf16.mxu0 0
    %391 = vmatpush1.bf16.msra.mxu0 0
    %392 = vmatprep.subr.bf16.mxu0 0
    %393 = vmatpush1.bf16.msra.mxu0 0
    %394 = vmatprep.subr.bf16.mxu0 0
    %395 = vmatpush1.bf16.msra.mxu0 0
    %396 = vmatprep.subr.bf16.mxu0 0
    %397 = vmatpush1.bf16.msra.mxu0 0
    %398 = vmatprep.subr.bf16.mxu0 0
    %399 = vmatpush1.bf16.msra.mxu0 0
    %400 = vmatprep.subr.bf16.mxu0 0
    %401 = vmatpush1.bf16.msra.mxu0 0
    %402 = vmatprep.mubr.bf16.mxu0 0
    %403 = vmatmul.mubr.bf16.gmra.mrb[0].mxu0 %v298
    %v404 = vpop.f32.mrb[0].mxu0
    %v405 = vadd.f32 %v320, %v404
    %v406 = vpop.f32.mrb[0].mxu0
    %v407 = vpop.f32.mrb[0].mxu0
    %v408 = vadd.f32 %v320, %v407
    %v409 = vpop.f32.mrb[0].mxu0
    %410 = vdwg.mxu0
    %411 = vst.msk [vmem:[#allocation2] sm:$0xff] %vm127, %v405
    %412 = vst.msk [vmem:[#allocation2 + $0x8] sm:$0xff] %vm127, %v408
    // Predicated region
    $region38: #{tpu_custom_call.1} parent=1 // pred_check
      _
    $region39: #{tpu_custom_call.1} parent=1 // pred_check_branch
      %414 = sbr.rel (0) target = $region41
    $region40: #{tpu_custom_call.1} parent=1 // pred_region
      %s416 = ssub.s32 256, 256
      %417 = vsyncadd [#allocation3], %s416
      %s418 = sshll.u32 [#allocation2], 4
      %s419 = int_to_ptr.vmem [resolvable:$true] %s418
      %424 = dma.vmem_to_hbm [thread:$0]  %s419, 256, %s9, [#allocation3], 128, 128, 8
    $region41: #{tpu_custom_call.1} parent=1 // pred_fallthru
      _
    // Predicated region
    $region42: #{tpu_custom_call.1} parent=1 // pred_check
      _
    $region43: #{tpu_custom_call.1} parent=1 // pred_check_branch
      %426 = sbr.rel (0) target = $region45
    $region44: #{tpu_custom_call.1} parent=1 // pred_region
      %427 = dma.done [#allocation3], 256
    $region45: #{tpu_custom_call.1} parent=1 // pred_fallthru
      _
    %428 = vsyncpa [#allocation3], 1

</llo_original>
